<compile_context>
chip_gen: v7x
topology: tpu7x:2x2x1
jax: 0.10.0
libtpu: 0.0.40
codegen_flags: <defaults>
</compile_context>

<pallas_src>
import jax
import jax.numpy as jnp
from jax.experimental import pallas as pl
from jax.experimental.pallas import tpu as pltpu

_LANE = 1024       # lane-dense last dim (multiple of 128)
_TILE_ROWS = 512   # rows per grid step (multiple of 8); 512*1024*4B = 2 MiB/tile f32


def _copy_kernel(x_ref, o_ref):
    # Elementwise pass-through on the VMEM tile.
    o_ref[...] = x_ref[...]


def _pallas_identity_2d(x2d, tile_rows):
    rows, lane = x2d.shape
    grid = (rows // tile_rows,)
    return pl.pallas_call(
        _copy_kernel,
        out_shape=jax.ShapeDtypeStruct(x2d.shape, x2d.dtype),
        grid=grid,
        in_specs=[pl.BlockSpec((tile_rows, lane), lambda i: (i, 0))],
        out_specs=pl.BlockSpec((tile_rows, lane), lambda i: (i, 0)),
        input_output_aliases={0: 0},
        compiler_params=pltpu.CompilerParams(
            dimension_semantics=("parallel",),
            vmem_limit_bytes=32 * 1024 * 1024,
        ),
    )(x2d)


@jax.jit
def model_forward(x: jax.Array):
    """Pallas implementation of _MODEL.forward's signature:
    returns (output, iterable_of_per_layer_outputs) with output == x."""
    orig_shape = x.shape
    n = x.size
    flat = x.reshape(-1)

    # Lane-dense slab: (padded_rows, 1024).  Small inputs use a single block
    # equal to the full slab (legal regardless of 8-divisibility); large
    # inputs are tiled into 512-row blocks and pipelined.
    rows = pl.cdiv(n, _LANE)
    if rows <= _TILE_ROWS:
        tile_rows = rows
        padded_rows = rows
    else:
        tile_rows = _TILE_ROWS
        padded_rows = tile_rows * pl.cdiv(rows, tile_rows)

    pad = padded_rows * _LANE - n
    if pad:
        flat = jnp.pad(flat, (0, pad))
    x2d = flat.reshape(padded_rows, _LANE)

    y2d = _pallas_identity_2d(x2d, tile_rows)

    y = y2d.reshape(-1)[:n].reshape(orig_shape)
    # Tuple[Tensor, Iterable[Tensor]]: single "layer" output list.
    return y, [y]


if __name__ == "__main__":
    key = jax.random.PRNGKey(0)
    x = jax.random.normal(key, (2, 4, 16, 16), dtype=jnp.float32)

    y, layer_outs = model_forward(x)
    jax.block_until_ready(y)
    jax.block_until_ready(layer_outs)

    assert y.shape == x.shape and y.dtype == x.dtype
    assert jnp.array_equal(y, x)
    assert len(layer_outs) == 1 and jnp.array_equal(layer_outs[0], x)

    print("KERNEL_OK")
</pallas_src>

<mosaic_0001>
module attributes {stable_mosaic.version = 11 : i64} {
  func.func @_copy_kernel(%arg0: i32, %arg1: memref<2x1024xf32, #tpu.memory_space<vmem>>, %arg2: memref<2x1024xf32, #tpu.memory_space<vmem>>) attributes {dimension_semantics = [#tpu.dimension_semantics<parallel>], iteration_bounds = array<i64: 1>, scalar_prefetch = 0 : i64, scratch_operands = 0 : i64, tpu.core_type = #tpu.core_type<tc>, window_params = [{transform_indices = @transform_0, window_bounds = array<i64: 2, 1024>}, {transform_indices = @transform_1, window_bounds = array<i64: 2, 1024>}]} {
    %c0 = arith.constant 0 : index
    %c0_0 = arith.constant 0 : index
    %0 = vector.load %arg1[%c0, %c0_0] : memref<2x1024xf32, #tpu.memory_space<vmem>>, vector<2x1024xf32>
    %c0_1 = arith.constant 0 : index
    %c0_2 = arith.constant 0 : index
    %1 = vector.load %arg2[%c0_1, %c0_2] : memref<2x1024xf32, #tpu.memory_space<vmem>>, vector<2x1024xf32>
    tpu.vector_store %arg2[%c0_1, %c0_2], %0 {strides = array<i32>} : memref<2x1024xf32, #tpu.memory_space<vmem>>, vector<2x1024xf32>,
    return
  }
  func.func @transform_0(%arg0: i32) -> (i32, i32) {
    %c0_i32 = arith.constant 0 : i32
    %c0_i32_0 = arith.constant 0 : i32
    return %arg0, %c0_i32 : i32, i32
  }
  func.func @transform_1(%arg0: i32) -> (i32, i32) {
    %c0_i32 = arith.constant 0 : i32
    %c0_i32_0 = arith.constant 0 : i32
    return %arg0, %c0_i32 : i32, i32
  }
}

</mosaic_0001>

<llo_original>
// kernel: model_forward.1
$region0: #{model_forward.1}
  #allocation0 [shape = 'u32[]', space=smem, size = 0x4, offset = 0x4, fixed_abs, tag = 'smem constant byte address 0x4 - core index']
  #allocation1 [shape = 'u32[144,128]{1,0:T(1,128)}', space=vmem, size = 0x12000, scoped, tag = 'internal scratch']
  %s0 = inlined_call_operand.vmem [shape: f32[2,1024], index: 0, kind: input, shape index: {}, may-alias: {0,1}]
  %s1 = inlined_call_operand.vmem [shape: f32[2,1024], index: 1, kind: output, shape index: {}, may-alias: {0,1}]
  %s2 = sld [smem:[#allocation0]]
  $region14: #{model_forward.1} parent=0
    _
  %s4 = ssub.s32 1, %s2
  %s5 = scalar_select 0, %s4, %s2
  // Predicated region
  $region2: #{model_forward.1} parent=0 // pred_check
    _
  $region3: #{model_forward.1} parent=0 // pred_check_branch
    %7 = sbr.rel (0) target = $region5
  $region4: #{model_forward.1} parent=0 // pred_region
    _
  $region5: #{model_forward.1} parent=0 // pred_fallthru
    _
  %v8 = vld [vmem:[%s0] sm:$0xff]
  %v9 = vld [vmem:[%s0 + $0x8] sm:$0xff]
  %10 = vst [vmem:[%s1] sm:$0xff] %v8
  %11 = vst [vmem:[%s1 + $0x8] sm:$0xff] %v9
  // Predicated region
  $region6: #{model_forward.1} parent=0 // pred_check
    _
  $region7: #{model_forward.1} parent=0 // pred_check_branch
    %13 = sbr.rel (0) target = $region9
  $region8: #{model_forward.1} parent=0 // pred_region
    _
  $region9: #{model_forward.1} parent=0 // pred_fallthru
    _
  // Predicated region
  $region10: #{model_forward.1} parent=0 // pred_check
    _
  $region11: #{model_forward.1} parent=0 // pred_check_branch
    %15 = sbr.rel (0) target = $region13
  $region12: #{model_forward.1} parent=0 // pred_region
    _
  $region13: #{model_forward.1} parent=0 // pred_fallthru
    _

</llo_original>
